<compile_context>
chip_gen: v7x
topology: tpu7x:2x2x1
jax: 0.10.0
libtpu: 0.0.40
codegen_flags: <defaults>
</compile_context>

<pallas_src>
import functools
import math

import jax
import jax.numpy as jnp
from jax.experimental import pallas as pl
from jax.experimental.pallas import tpu as pltpu

_TARGET_BLOCK_BYTES = 2 << 20   # ~2 MiB of HBM per input block per grid step


def _lcm(a, b):
    return a * b // math.gcd(a, b)


def _num_tensorcores():
    """Best-effort TensorCore count (v7x: 2, v5e/v6e: 1). Correctness never depends on it."""
    try:
        info = pltpu.get_tpu_info()
    except Exception:
        return 1
    for attr in ("num_cores", "core_count", "num_tensorcores",
                 "tensorcore_count", "cores_per_chip"):
        v = getattr(info, attr, None)
        if isinstance(v, int) and v > 0:
            return min(v, 2)
    return 1


def _vmem_capacity_bytes():
    try:
        info = pltpu.get_tpu_info()
        v = getattr(info, "vmem_capacity_bytes", None)
        if isinstance(v, int) and v > 0:
            return v
    except Exception:
        pass
    return 64 << 20   # v7x (smallest physical VMEM) as a conservative fallback


def _sq_diff_kernel(p_ref, t_ref, acc_ref, *, split_rows, blocks_per_core,
                    row_tile, hw_tile, n_rows, n_hw, check_rows, check_hw):
    """Accumulate (pred - targ)^2 elementwise into a per-core resident slab."""
    c = pl.program_id(0)    # core-split axis ("parallel")
    ib = pl.program_id(1)   # row-block axis
    j = pl.program_id(2)    # spatial-block axis

    @pl.when(jnp.logical_and(ib == 0, j == 0))
    def _():
        acc_ref[...] = jnp.zeros_like(acc_ref)

    p = p_ref[...].astype(jnp.float32)
    t = t_ref[...].astype(jnp.float32)
    d = p - t
    sq = d * d

    if not (check_rows or check_hw):
        # No ragged blocks and no core-split overflow are possible: pure
        # streaming accumulate on every step.
        acc_ref[...] += sq
        return

    # Logical (unclamped) block indices; the clamped duplicate (overflow) block
    # has logical element indices past the array end, so the same element mask
    # also zeroes it.
    if split_rows:
        row_blk = c * blocks_per_core + ib
        hw_blk = j
    else:
        row_blk = ib
        hw_blk = c * blocks_per_core + j

    conds = []
    if check_rows:
        conds.append((row_blk + 1) * row_tile > n_rows)
    if check_hw:
        conds.append((hw_blk + 1) * hw_tile > n_hw)
    is_edge = conds[0]
    for extra in conds[1:]:
        is_edge = jnp.logical_or(is_edge, extra)

    @pl.when(jnp.logical_not(is_edge))
    def _():   # interior blocks: bare accumulate
        acc_ref[...] += sq

    @pl.when(is_edge)
    def _():   # edge / overflow blocks only: build the mask
        valid = None
        if check_rows:
            rows = row_blk * row_tile + jax.lax.broadcasted_iota(
                jnp.int32, sq.shape, 0)
            valid = rows < n_rows
        if check_hw:
            cols = hw_blk * hw_tile + jax.lax.broadcasted_iota(
                jnp.int32, sq.shape, 1)
            vcols = cols < n_hw
            valid = vcols if valid is None else jnp.logical_and(valid, vcols)
        acc_ref[...] += jnp.where(valid, sq, 0.0)   # NaN-safe select


def _choose_tiles(n_rows, n_hw, row_unit, target_elems):
    """Pick (row_tile, hw_tile) for the 2-D (B*C, H*W) view."""
    if n_rows * n_hw <= target_elems:
        return n_rows, n_hw
    # Keep the full row extent when it is small enough to leave room for a
    # >=128-lane spatial tile; otherwise tile rows in row_unit multiples.
    if n_rows <= max(row_unit, target_elems // 128):
        row_tile = n_rows
    else:
        row_tile = (target_elems // max(n_hw, 1)) // row_unit * row_unit
        row_tile = max(row_unit, min(row_tile, (n_rows // row_unit) * row_unit))
    budget = max(1, target_elems // row_tile)
    if n_hw <= max(budget, 128):
        hw_tile = n_hw                                   # full extent (exempt)
    else:
        hw_tile = min(n_hw, max(128, (budget // 128) * 128))
    return row_tile, hw_tile


def custom_loss(predictions, targets, alpha=0.5, *,
                target_block_elems=None, num_core_splits=None):
    """CustomLoss.forward: alpha*mse(pred[:, :2], t[:, :2]) + (1-alpha)*mse(pred[:, 2:], t[:, 2:])."""
    assert predictions.shape == targets.shape
    assert predictions.ndim == 4, "expected NCHW inputs"
    batch, chans, height, width = predictions.shape
    assert chans > 2, "CustomLoss splits channels at index 2"
    hw = height * width
    n_rows = batch * chans

    itemsize = jnp.dtype(predictions.dtype).itemsize
    if target_block_elems is None:
        target_block_elems = max(8 * 128, _TARGET_BLOCK_BYTES // itemsize)

    # Free (contiguous) 2-D views -- no extra HBM pass, full sublane packing.
    p2 = predictions.reshape(n_rows, hw)
    t2 = targets.reshape(n_rows, hw)

    sublane = 8 * max(1, 4 // itemsize)        # f32: 8, bf16: 16, int8/fp8: 32
    row_unit = _lcm(chans, sublane)            # keeps channel identity per row slot
    row_tile, hw_tile = _choose_tiles(n_rows, hw, row_unit, target_block_elems)

    nb_r = pl.cdiv(n_rows, row_tile)
    nb_hw = pl.cdiv(hw, hw_tile)

    if num_core_splits is None:
        num_core_splits = _num_tensorcores()

    # Split whichever block axis is larger across (up to) two TensorCores.
    split_rows = nb_r >= nb_hw
    nb_split = nb_r if split_rows else nb_hw
    ncs = max(1, min(num_core_splits, nb_split))
    blocks_per_core = pl.cdiv(nb_split, ncs)
    overflow = ncs * blocks_per_core > nb_split

    if split_rows:
        grid = (ncs, blocks_per_core, nb_hw)
        if overflow:
            def in_map(c, ib, j):
                return (jnp.minimum(c * blocks_per_core + ib, nb_r - 1), j)
        else:
            def in_map(c, ib, j):
                return (c * blocks_per_core + ib, j)
    else:
        grid = (ncs, nb_r, blocks_per_core)
        if overflow:
            def in_map(c, ib, j):
                return (ib, jnp.minimum(c * blocks_per_core + j, nb_hw - 1))
        else:
            def in_map(c, ib, j):
                return (ib, c * blocks_per_core + j)

    check_rows = (n_rows % row_tile != 0) or (split_rows and overflow)
    check_hw = (hw % hw_tile != 0) or ((not split_rows) and overflow)

    kernel = functools.partial(
        _sq_diff_kernel,
        split_rows=split_rows, blocks_per_core=blocks_per_core,
        row_tile=row_tile, hw_tile=hw_tile, n_rows=n_rows, n_hw=hw,
        check_rows=check_rows, check_hw=check_hw)

    in_spec = pl.BlockSpec((row_tile, hw_tile), in_map)
    # One resident f32 accumulator slab per core split; written back once.
    out_spec = pl.BlockSpec((None, row_tile, hw_tile), lambda c, ib, j: (c, 0, 0))
    out_shape = jax.ShapeDtypeStruct((ncs, row_tile, hw_tile), jnp.float32)

    in_block_bytes = row_tile * hw_tile * itemsize
    out_block_bytes = row_tile * hw_tile * 4
    vmem_limit = 4 * in_block_bytes + 2 * out_block_bytes + (16 << 20)
    vmem_limit = min(vmem_limit, (_vmem_capacity_bytes() * 3) // 4)
    vmem_limit = max(vmem_limit, 16 << 20)

    total = n_rows * hw
    cost = pl.CostEstimate(
        flops=3 * total, transcendentals=0,
        bytes_accessed=2 * total * itemsize + ncs * out_block_bytes)

    partials = pl.pallas_call(
        kernel,
        out_shape=out_shape,
        grid_spec=pltpu.PrefetchScalarGridSpec(
            num_scalar_prefetch=0,
            grid=grid,
            in_specs=[in_spec, in_spec],
            out_specs=out_spec,
        ),
        compiler_params=pltpu.CompilerParams(
            dimension_semantics=("parallel", "arbitrary", "arbitrary"),
            vmem_limit_bytes=int(vmem_limit)),
        cost_estimate=cost,
    )(p2, t2)

    # row_tile is a multiple of chans, so within-slab row r always holds
    # channel (r % chans): the params/los split is a static slice after a
    # free reshape.  The tiny final reduction stays in plain JAX.
    per_chan = partials.reshape(ncs, row_tile // chans, chans, hw_tile)
    sse_params = jnp.sum(per_chan[:, :, :2, :])
    sse_los = jnp.sum(per_chan[:, :, 2:, :])
    mse_params = sse_params / jnp.float32(batch * 2 * hw)
    mse_los = sse_los / jnp.float32(batch * (chans - 2) * hw)
    return alpha * mse_params + (1.0 - alpha) * mse_los


def _reference(predictions, targets, alpha=0.5):
    p = predictions.astype(jnp.float32)
    t = targets.astype(jnp.float32)
    mse_params = jnp.mean((p[:, :2] - t[:, :2]) ** 2)
    mse_los = jnp.mean((p[:, 2:] - t[:, 2:]) ** 2)
    return alpha * mse_params + (1.0 - alpha) * mse_los


if __name__ == "__main__":
    key = jax.random.PRNGKey(0)

    # Primary case: NCHW inputs as the surrounding U-Net code would produce
    # (2 "params" channels + 2 "los" channels).
    kp, kt, key = jax.random.split(key, 3)
    shape = (2, 4, 16, 16)
    predictions = jax.random.normal(kp, shape, dtype=jnp.float32)
    targets = jax.random.normal(kt, shape, dtype=jnp.float32) * 2.0 + 0.5

    out = jax.block_until_ready(custom_loss(predictions, targets))
    ref = _reference(predictions, targets)
    assert jnp.allclose(out, ref, rtol=1e-4, atol=1e-6), (out, ref)

    # Stress the tiling / masking / core-split / dtype paths with small forced
    # block sizes: ragged HW blocks, explicit 2-way split with overflow clamp,
    # ragged row blocks, clean interior-only tiling, and bf16 inputs.
    cases = (
        ((3, 5, 12, 20), jnp.float32, 1024, None, 0.3),
        ((2, 4, 16, 24), jnp.float32, 1024, 2, 0.3),
        ((17, 4, 4, 4), jnp.float32, 256, None, 0.7),
        ((3, 4, 16, 16), jnp.float32, 2048, None, 0.3),
        ((4, 4, 32, 64), jnp.bfloat16, 4096, None, 0.5),
    )
    for shp, dt, tbe, ncs, al in cases:
        kp, kt, key = jax.random.split(key, 3)
        p = jax.random.normal(kp, shp, dtype=jnp.float32) * 1.2
        t = jax.random.normal(kt, shp, dtype=jnp.float32) * 1.5 - 0.25
        p = p.astype(dt)
        t = t.astype(dt)
        got = jax.block_until_ready(
            custom_loss(p, t, alpha=al, target_block_elems=tbe,
                        num_core_splits=ncs))
        want = _reference(p, t, alpha=al)
        assert jnp.allclose(got, want, rtol=1e-4, atol=1e-6), (shp, got, want)

    print("KERNEL_OK")
</pallas_src>

<mosaic_0001>
module attributes {stable_mosaic.version = 11 : i64} {
  func.func @_sq_diff_kernel(%arg0: i32, %arg1: i32, %arg2: i32, %arg3: memref<8x256xf32, #tpu.memory_space<vmem>>, %arg4: memref<8x256xf32, #tpu.memory_space<vmem>>, %arg5: memref<1x8x256xf32, #tpu.memory_space<vmem>>) attributes {dimension_semantics = [#tpu.dimension_semantics<parallel>, #tpu.dimension_semantics<arbitrary>, #tpu.dimension_semantics<arbitrary>], iteration_bounds = array<i64: 1, 1, 1>, scalar_prefetch = 0 : i64, scratch_operands = 0 : i64, tpu.core_type = #tpu.core_type<tc>, window_params = [{transform_indices = @transform_0, window_bounds = array<i64: 8, 256>}, {transform_indices = @transform_1, window_bounds = array<i64: 8, 256>}, {transform_indices = @transform_2, window_bounds = array<i64: 1, 8, 256>}]} {
    %c0_i32 = arith.constant 0 : i32
    %0 = arith.cmpi eq, %arg1, %c0_i32 : i32
    %c0_i32_0 = arith.constant 0 : i32
    %1 = arith.cmpi eq, %arg2, %c0_i32_0 : i32
    %2 = arith.andi %0, %1 : i1
    %3 = arith.extui %2 : i1 to i32
    %c0_i32_1 = arith.constant 0 : i32
    %4 = arith.cmpi ne, %3, %c0_i32_1 : i32
    scf.if %4 {
      %cst = arith.constant 0.000000e+00 : f32
      %15 = vector.broadcast %cst : f32 to vector<8x256xf32>
      %c0_11 = arith.constant 0 : index
      %c0_12 = arith.constant 0 : index
      %c0_13 = arith.constant 0 : index
      %16 = vector.load %arg5[%c0_11, %c0_12, %c0_13] : memref<1x8x256xf32, #tpu.memory_space<vmem>>, vector<1x8x256xf32>
      %17 = vector.shape_cast %16 : vector<1x8x256xf32> to vector<8x256xf32>
      %18 = vector.shape_cast %15 : vector<8x256xf32> to vector<1x8x256xf32>
      tpu.vector_store %arg5[%c0_11, %c0_12, %c0_13], %18 {strides = array<i32>} : memref<1x8x256xf32, #tpu.memory_space<vmem>>, vector<1x8x256xf32>,
    } else {
    }
    %c0 = arith.constant 0 : index
    %c0_2 = arith.constant 0 : index
    %5 = vector.load %arg3[%c0, %c0_2] : memref<8x256xf32, #tpu.memory_space<vmem>>, vector<8x256xf32>
    %c0_3 = arith.constant 0 : index
    %c0_4 = arith.constant 0 : index
    %6 = vector.load %arg4[%c0_3, %c0_4] : memref<8x256xf32, #tpu.memory_space<vmem>>, vector<8x256xf32>
    %7 = arith.subf %5, %6 : vector<8x256xf32>
    %8 = arith.mulf %7, %7 : vector<8x256xf32>
    %c0_5 = arith.constant 0 : index
    %c0_6 = arith.constant 0 : index
    %c0_7 = arith.constant 0 : index
    %9 = vector.load %arg5[%c0_5, %c0_6, %c0_7] : memref<1x8x256xf32, #tpu.memory_space<vmem>>, vector<1x8x256xf32>
    %10 = vector.shape_cast %9 : vector<1x8x256xf32> to vector<8x256xf32>
    %11 = arith.addf %10, %8 : vector<8x256xf32>
    %c0_8 = arith.constant 0 : index
    %c0_9 = arith.constant 0 : index
    %c0_10 = arith.constant 0 : index
    %12 = vector.load %arg5[%c0_8, %c0_9, %c0_10] : memref<1x8x256xf32, #tpu.memory_space<vmem>>, vector<1x8x256xf32>
    %13 = vector.shape_cast %12 : vector<1x8x256xf32> to vector<8x256xf32>
    %14 = vector.shape_cast %11 : vector<8x256xf32> to vector<1x8x256xf32>
    tpu.vector_store %arg5[%c0_8, %c0_9, %c0_10], %14 {strides = array<i32>} : memref<1x8x256xf32, #tpu.memory_space<vmem>>, vector<1x8x256xf32>,
    return
  }
  func.func @transform_0(%arg0: i32, %arg1: i32, %arg2: i32) -> (i32, i32) {
    %c1_i32 = arith.constant 1 : i32
    %0 = arith.muli %arg0, %c1_i32 : i32
    %1 = arith.addi %0, %arg1 : i32
    %c0_i32 = arith.constant 0 : i32
    return %1, %arg2 : i32, i32
  }
  func.func @transform_1(%arg0: i32, %arg1: i32, %arg2: i32) -> (i32, i32) {
    %c1_i32 = arith.constant 1 : i32
    %0 = arith.muli %arg0, %c1_i32 : i32
    %1 = arith.addi %0, %arg1 : i32
    %c0_i32 = arith.constant 0 : i32
    return %1, %arg2 : i32, i32
  }
  func.func @transform_2(%arg0: i32, %arg1: i32, %arg2: i32) -> (i32, i32, i32) {
    %c0_i32 = arith.constant 0 : i32
    %c0_i32_0 = arith.constant 0 : i32
    %c0_i32_1 = arith.constant 0 : i32
    return %arg0, %c0_i32, %c0_i32_0 : i32, i32, i32
  }
}

</mosaic_0001>

<llo_original>
// kernel: tpu_custom_call.1
$region0: #{tpu_custom_call.1}
  #allocation0 [shape = 'u32[]', space=smem, size = 0x4, offset = 0x4, fixed_abs, tag = 'smem constant byte address 0x4 - core index']
  #allocation1 [shape = 'u32[144,128]{1,0:T(1,128)}', space=vmem, size = 0x12000, scoped, tag = 'internal scratch']
  %s0 = inlined_call_operand.hbm [shape: f32[8,256], index: 0, kind: input, shape index: {}]
  %s1 = inlined_call_operand.hbm [shape: f32[8,256], index: 1, kind: input, shape index: {}]
  %s2 = inlined_call_operand.hbm [shape: f32[1,8,256], index: 2, kind: output, shape index: {}]
  %s3 = sld [smem:[#allocation0]]
  $region30: #{tpu_custom_call.1} parent=0
    _
  %s5 = ssub.s32 1, %s3
  %s6 = scalar_select 0, %s5, %s3
  $region1: #{tpu_custom_call.1} parent=0
    #allocation2 [shape = 'u8[8192]{0}', space=vmem, size = 0x2000, scoped, tag = 'input window, operand 0, single buffered']
    #allocation3 [shape = 's32[1]{0}', space=sflag, size = 0x4, scoped, tag = 'scoped memory for tpu_custom_call.1']
    #allocation4 [shape = 's32[1]{0}', space=sflag, size = 0x4, scoped, tag = 'scoped memory for tpu_custom_call.1']
    #allocation5 [shape = 'u8[8192]{0}', space=vmem, size = 0x2000, scoped, tag = 'input window, operand 1, single buffered']
    #allocation6 [shape = 's32[1]{0}', space=sflag, size = 0x4, scoped, tag = 'scoped memory for tpu_custom_call.1']
    #allocation7 [shape = 'u8[8192]{0}', space=vmem, size = 0x2000, scoped, tag = 'output window, operand 0, single buffered']
    %7 = vsyncpa [#allocation3], 0
    %8 = vsyncpa [#allocation6], 0
    %9 = vsyncpa [#allocation4], 0
    // Predicated region
    $region2: #{tpu_custom_call.1} parent=1 // pred_check
      _
    $region3: #{tpu_custom_call.1} parent=1 // pred_check_branch
      %11 = sbr.rel (0) target = $region5
    $region4: #{tpu_custom_call.1} parent=1 // pred_region
      %s12 = sadd.s32 0, 0
      %s14 = ssub.s32 256, 256
      %15 = vsyncadd [#allocation3], %s14
      %s16 = smul.addr %s12, 2
      %s17 = smul.addr %s16, 128
      %s18 = scalar_lea.hbm %s0, %s17
      %s20 = sshll.u32 [#allocation2], 4
      %s21 = int_to_ptr.vmem [resolvable:$true] %s20
      %23 = dma.hbm_to_vmem [thread:$0]  %s18, 256, %s21, [#allocation3]
    $region5: #{tpu_custom_call.1} parent=1 // pred_fallthru
      _
    // Predicated region
    $region6: #{tpu_custom_call.1} parent=1 // pred_check
      _
    $region7: #{tpu_custom_call.1} parent=1 // pred_check_branch
      %25 = sbr.rel (0) target = $region9
    $region8: #{tpu_custom_call.1} parent=1 // pred_region
      %s26 = sadd.s32 0, 0
      %s28 = ssub.s32 256, 256
      %29 = vsyncadd [#allocation6], %s28
      %s30 = smul.addr %s26, 2
      %s31 = smul.addr %s30, 128
      %s32 = scalar_lea.hbm %s1, %s31
      %s34 = sshll.u32 [#allocation5], 4
      %s35 = int_to_ptr.vmem [resolvable:$true] %s34
      %37 = dma.hbm_to_vmem [thread:$0]  %s32, 256, %s35, [#allocation6]
    $region9: #{tpu_custom_call.1} parent=1 // pred_fallthru
      _
    // Predicated region
    $region10: #{tpu_custom_call.1} parent=1 // pred_check
      _
    $region11: #{tpu_custom_call.1} parent=1 // pred_check_branch
      %39 = sbr.rel (0) target = $region13
    $region12: #{tpu_custom_call.1} parent=1 // pred_region
      %40 = dma.done [#allocation3], 256
    $region13: #{tpu_custom_call.1} parent=1 // pred_fallthru
      _
    // Predicated region
    $region14: #{tpu_custom_call.1} parent=1 // pred_check
      _
    $region15: #{tpu_custom_call.1} parent=1 // pred_check_branch
      %42 = sbr.rel (0) target = $region17
    $region16: #{tpu_custom_call.1} parent=1 // pred_region
      %43 = dma.done [#allocation6], 256
    $region17: #{tpu_custom_call.1} parent=1 // pred_fallthru
      _
    %s44 = sadd.s32 0, 0
    %s45 = sadd.s32 0, 0
    %p46 = scmp.eq.s32.totalorder 0, 0
    %p47 = scmp.eq.s32.totalorder 0, 0
    %p48 = pnand %p46, %p47
    %p49 = pneg %p48
    // Predicated region
    $region18: #{tpu_custom_call.1} parent=1 // pred_check
      _
    $region19: #{tpu_custom_call.1} parent=1 // pred_check_branch
      %51 = sbr.rel (%p48) target = $region21
    $region20: #{tpu_custom_call.1} parent=1 // pred_region
      %52 = vst [vmem:[#allocation7] sm:$0xff] 0.0
      %53 = vst [vmem:[#allocation7 + $0x8] sm:$0xff] 0.0
    $region21: #{tpu_custom_call.1} parent=1 // pred_fallthru
      _
    %v54 = vld [vmem:[#allocation2] sm:$0xff]
    %v55 = vld [vmem:[#allocation2 + $0x8] sm:$0xff]
    %v56 = vld [vmem:[#allocation5] sm:$0xff]
    %v57 = vld [vmem:[#allocation5 + $0x8] sm:$0xff]
    %v58 = vsub.f32 %v54, %v56
    %v59 = vsub.f32 %v55, %v57
    %v60 = vmul.f32 %v58, %v58
    %v61 = vmul.f32 %v59, %v59
    %v62 = vld [vmem:[#allocation7] sm:$0xff]
    %v63 = vld [vmem:[#allocation7 + $0x8] sm:$0xff]
    %v64 = vadd.f32 %v62, %v60
    %v65 = vadd.f32 %v63, %v61
    %66 = vst [vmem:[#allocation7] sm:$0xff] %v64
    %67 = vst [vmem:[#allocation7 + $0x8] sm:$0xff] %v65
    // Predicated region
    $region22: #{tpu_custom_call.1} parent=1 // pred_check
      _
    $region23: #{tpu_custom_call.1} parent=1 // pred_check_branch
      %69 = sbr.rel (0) target = $region25
    $region24: #{tpu_custom_call.1} parent=1 // pred_region
      %s71 = ssub.s32 256, 256
      %72 = vsyncadd [#allocation4], %s71
      %s74 = sshll.u32 [#allocation7], 4
      %s75 = int_to_ptr.vmem [resolvable:$true] %s74
      %77 = dma.vmem_to_hbm [thread:$0]  %s75, 256, %s2, [#allocation4]
    $region25: #{tpu_custom_call.1} parent=1 // pred_fallthru
      _
    // Predicated region
    $region26: #{tpu_custom_call.1} parent=1 // pred_check
      _
    $region27: #{tpu_custom_call.1} parent=1 // pred_check_branch
      %79 = sbr.rel (0) target = $region29
    $region28: #{tpu_custom_call.1} parent=1 // pred_region
      %80 = dma.done [#allocation4], 256
    $region29: #{tpu_custom_call.1} parent=1 // pred_fallthru
      _
    %81 = vsyncpa [#allocation3], 1
    %82 = vsyncpa [#allocation6], 1
    %83 = vsyncpa [#allocation4], 1

</llo_original>
